<compile_context>
chip_gen: v5e
topology: v5e:2x2
jax: 0.10.0
libtpu: 0.0.40
codegen_flags: <defaults>
</compile_context>

<pallas_src>
from functools import partial

import jax
import jax.numpy as jnp
from jax.experimental import pallas as pl
from jax.experimental.pallas import tpu as pltpu


def _dqn_kernel(x_ref, w1_ref, b1_ref, w2_ref, b2_ref, wq_ref, bq_ref, q_ref,
                *, bf16_epilogue: bool):
    x = x_ref[...]                       # (tb, 2) f32

    # fc1 + ReLU as a VPU outer-product: K=2 would waste the MXU entirely.
    w1 = w1_ref[...]                     # (2, 512) f32
    h1 = x[:, 0:1] * w1[0:1, :] + x[:, 1:2] * w1[1:2, :] + b1_ref[...]
    h1 = jnp.maximum(h1, 0.0)            # (tb, 512) f32

    # fc2 on the MXU: bf16 inputs, f32 accumulation.
    acc = jnp.dot(h1.astype(jnp.bfloat16), w2_ref[...],
                  preferred_element_type=jnp.float32)        # (tb, 512) f32

    if bf16_epilogue:
        # v6e / v7x: VPU has bf16 — do bias + ReLU packed 2x per vreg.  The
        # bf16 cast is needed for the head matmul anyway.
        h2 = acc.astype(jnp.bfloat16) + b2_ref[...].astype(jnp.bfloat16)
        h2 = jnp.maximum(h2, 0.0)                            # (tb, 512) bf16
    else:
        # v5e: no bf16 VPU — keep the elementwise epilogue in f32.
        h2 = jnp.maximum(acc + b2_ref[...], 0.0).astype(jnp.bfloat16)

    # Fused dueling head: w_q = wv + w3, b_q = bv + b3 (folded offline), so a
    # single MXU issue produces q directly.
    q = jnp.dot(h2, wq_ref[...], preferred_element_type=jnp.float32) + bq_ref[...]
    q_ref[...] = q.astype(q_ref.dtype)                       # (tb, 2)


def _bf16_epilogue_ok() -> bool:
    """bf16 VPU arithmetic is available on v6e / v7x; not on v5e and earlier."""
    try:
        kind = jax.devices()[0].device_kind.lower()
    except Exception:
        return False
    return ("v6" in kind) or ("7" in kind)


def dqn_forward(x, params, *, bf16_epilogue=None):
    """x: (B, 2) f32. params: dict with w1/b1/b2/b_q (f32), w2/w_q (bf16)."""
    B = x.shape[0]
    if bf16_epilogue is None:
        bf16_epilogue = _bf16_epilogue_ok()

    # Bounded batch tile: pad B up to a multiple of tb (tb <= 256) instead of
    # ever taking tb = B.  Keeps VMEM constant, fills the wide MXU, and gives
    # the parallel grid >= 2 steps for v7x dual-core sharding at large B.
    TB_MAX = 256
    Bp = ((B + 7) // 8) * 8              # (8, 128) sublane rule on the batch dim
    if Bp <= TB_MAX:
        tb = Bp
    else:
        tb = TB_MAX
        Bp = ((B + tb - 1) // tb) * tb
    if Bp != B:
        x = jnp.pad(x, ((0, Bp - B), (0, 0)))
    grid = (Bp // tb,)

    const2 = lambda i: (0, 0)            # weights: fetched once, VMEM-resident
    in_specs = [
        pl.BlockSpec((tb, 2), lambda i: (i, 0)),        # x
        pl.BlockSpec((2, 512), const2),                 # w1 (f32, VPU path)
        pl.BlockSpec((1, 512), const2),                 # b1
        pl.BlockSpec((512, 512), const2),               # w2 (bf16)
        pl.BlockSpec((1, 512), const2),                 # b2
        pl.BlockSpec((512, 2), const2),                 # w_q = wv + w3 (bf16)
        pl.BlockSpec((1, 2), const2),                   # b_q = bv + b3
    ]
    out_spec = pl.BlockSpec((tb, 2), lambda i: (i, 0))

    nbytes = lambda a: a.size * a.dtype.itemsize
    bytes_accessed = (Bp * 2 * 4 + Bp * 2 * 4
                      + sum(nbytes(params[k]) for k in
                            ("w1", "b1", "w2", "b2", "w_q", "b_q")))
    cost = pl.CostEstimate(flops=2 * Bp * 512 * (2 + 512 + 2),
                           transcendentals=0,
                           bytes_accessed=int(bytes_accessed))

    q_padded = pl.pallas_call(
        partial(_dqn_kernel, bf16_epilogue=bf16_epilogue),
        out_shape=jax.ShapeDtypeStruct((Bp, 2), jnp.float32),
        grid=grid,
        in_specs=in_specs,
        out_specs=out_spec,
        compiler_params=pltpu.CompilerParams(
            dimension_semantics=("parallel",)),
        cost_estimate=cost,
    )(x, params["w1"], params["b1"], params["w2"], params["b2"],
      params["w_q"], params["b_q"])
    return q_padded[:B] if Bp != B else q_padded


def init_params(key):
    """Deterministic init matching the PyTorch module's shapes (dueling=True).

    PyTorch nn.Linear(in, out) has weight (out, in); we store the transpose
    (in, out) so layers compute x @ W + b.  The dueling combine q = v + a is
    folded into the head weights in f32 (w_q = wv + w3, b_q = bv + b3) before
    the bf16 cast; the big tensors are stored in bf16 (f32-accumulated on MXU).
    """
    def linear(k, fan_in, fan_out):
        kw, kb = jax.random.split(k)
        bound = 1.0 / (fan_in ** 0.5)    # PyTorch default U(-1/sqrt(in), 1/sqrt(in))
        w = jax.random.uniform(kw, (fan_in, fan_out), jnp.float32, -bound, bound)
        b = jax.random.uniform(kb, (1, fan_out), jnp.float32, -bound, bound)
        return w, b

    k1, k2, k3, kv = jax.random.split(key, 4)
    w1, b1 = linear(k1, 2, 512)
    w2, b2 = linear(k2, 512, 512)
    w3, b3 = linear(k3, 512, 2)
    wv, bv = linear(kv, 512, 1)
    # Fold dueling combine: q = (h2 @ wv + bv) + (h2 @ w3 + b3)
    #                         = h2 @ (wv + w3) + (bv + b3).  Sum in f32 first.
    w_q = (wv + w3).astype(jnp.bfloat16)            # (512, 2)
    b_q = bv + b3                                   # (1, 2) f32
    return {
        "w1": w1, "b1": b1,
        "w2": w2.astype(jnp.bfloat16), "b2": b2,
        "w_q": w_q, "b_q": b_q,
    }


def dqn_reference(x, p, *, bf16_epilogue):
    """Plain-JAX reference mirroring the kernel's dtypes / fused-head math."""
    h1 = jnp.maximum(x @ p["w1"] + p["b1"], 0.0)
    acc = jnp.dot(h1.astype(jnp.bfloat16), p["w2"],
                  preferred_element_type=jnp.float32)
    if bf16_epilogue:
        h2 = jnp.maximum(acc.astype(jnp.bfloat16) + p["b2"].astype(jnp.bfloat16),
                         0.0)
    else:
        h2 = jnp.maximum(acc + p["b2"], 0.0).astype(jnp.bfloat16)
    return jnp.dot(h2, p["w_q"], preferred_element_type=jnp.float32) + p["b_q"]


if __name__ == "__main__":
    key = jax.random.PRNGKey(0)
    kp, kx = jax.random.split(key)

    params = init_params(kp)
    # MountainCar observation: 2 features (position, velocity); small batch.
    x = jax.random.normal(kx, (8, 2), jnp.float32)

    use_bf16_epi = _bf16_epilogue_ok()
    q = jax.block_until_ready(dqn_forward(x, params, bf16_epilogue=use_bf16_epi))
    q_ref = dqn_reference(x, params, bf16_epilogue=use_bf16_epi)

    assert q.shape == (8, 2)
    assert jnp.allclose(q, q_ref, atol=1e-3, rtol=1e-3), "mismatch vs JAX reference"

    print("KERNEL_OK")
</pallas_src>

<mosaic_0001>
module attributes {stable_mosaic.version = 11 : i64} {
  func.func @_dqn_kernel(%arg0: i32, %arg1: memref<8x2xf32, #tpu.memory_space<vmem>>, %arg2: memref<2x512xf32, #tpu.memory_space<vmem>>, %arg3: memref<1x512xf32, #tpu.memory_space<vmem>>, %arg4: memref<512x512xbf16, #tpu.memory_space<vmem>>, %arg5: memref<1x512xf32, #tpu.memory_space<vmem>>, %arg6: memref<512x2xbf16, #tpu.memory_space<vmem>>, %arg7: memref<1x2xf32, #tpu.memory_space<vmem>>, %arg8: memref<8x2xf32, #tpu.memory_space<vmem>>) attributes {dimension_semantics = [#tpu.dimension_semantics<parallel>], iteration_bounds = array<i64: 1>, scalar_prefetch = 0 : i64, scratch_operands = 0 : i64, tpu.core_type = #tpu.core_type<tc>, window_params = [{transform_indices = @transform_0, window_bounds = array<i64: 8, 2>}, {pipeline_mode = #tpu.pipeline_mode<synchronous>, transform_indices = @transform_1, window_bounds = array<i64: 2, 512>}, {pipeline_mode = #tpu.pipeline_mode<synchronous>, transform_indices = @transform_2, window_bounds = array<i64: 1, 512>}, {pipeline_mode = #tpu.pipeline_mode<synchronous>, transform_indices = @transform_3, window_bounds = array<i64: 512, 512>}, {pipeline_mode = #tpu.pipeline_mode<synchronous>, transform_indices = @transform_4, window_bounds = array<i64: 1, 512>}, {pipeline_mode = #tpu.pipeline_mode<synchronous>, transform_indices = @transform_5, window_bounds = array<i64: 512, 2>}, {pipeline_mode = #tpu.pipeline_mode<synchronous>, transform_indices = @transform_6, window_bounds = array<i64: 1, 2>}, {transform_indices = @transform_7, window_bounds = array<i64: 8, 2>}]} {
    %c0 = arith.constant 0 : index
    %c0_0 = arith.constant 0 : index
    %0 = vector.load %arg1[%c0, %c0_0] : memref<8x2xf32, #tpu.memory_space<vmem>>, vector<8x2xf32>
    %c0_1 = arith.constant 0 : index
    %c0_2 = arith.constant 0 : index
    %1 = vector.load %arg2[%c0_1, %c0_2] : memref<2x512xf32, #tpu.memory_space<vmem>>, vector<2x512xf32>
    %2 = vector.extract_strided_slice %0 {offsets = [0, 0], sizes = [8, 1], strides = [1, 1]} : vector<8x2xf32> to vector<8x1xf32>
    %3 = vector.extract_strided_slice %1 {offsets = [0, 0], sizes = [1, 512], strides = [1, 1]} : vector<2x512xf32> to vector<1x512xf32>
    %4 = vector.broadcast %2 : vector<8x1xf32> to vector<8x512xf32>
    %5 = vector.broadcast %3 : vector<1x512xf32> to vector<8x512xf32>
    %6 = arith.mulf %4, %5 : vector<8x512xf32>
    %7 = vector.extract_strided_slice %0 {offsets = [0, 1], sizes = [8, 1], strides = [1, 1]} : vector<8x2xf32> to vector<8x1xf32>
    %8 = vector.extract_strided_slice %1 {offsets = [1, 0], sizes = [1, 512], strides = [1, 1]} : vector<2x512xf32> to vector<1x512xf32>
    %9 = vector.broadcast %7 : vector<8x1xf32> to vector<8x512xf32>
    %10 = vector.broadcast %8 : vector<1x512xf32> to vector<8x512xf32>
    %11 = arith.mulf %9, %10 : vector<8x512xf32>
    %12 = arith.addf %6, %11 : vector<8x512xf32>
    %c0_3 = arith.constant 0 : index
    %c0_4 = arith.constant 0 : index
    %13 = vector.load %arg3[%c0_3, %c0_4] : memref<1x512xf32, #tpu.memory_space<vmem>>, vector<1x512xf32>
    %14 = vector.broadcast %13 : vector<1x512xf32> to vector<8x512xf32>
    %15 = arith.addf %12, %14 : vector<8x512xf32>
    %cst = arith.constant 0.000000e+00 : f32
    %16 = vector.broadcast %cst : f32 to vector<8x512xf32>
    %17 = arith.maximumf %15, %16 : vector<8x512xf32>
    %18 = arith.truncf %17 : vector<8x512xf32> to vector<8x512xbf16>
    %c0_5 = arith.constant 0 : index
    %c0_6 = arith.constant 0 : index
    %19 = vector.load %arg4[%c0_5, %c0_6] : memref<512x512xbf16, #tpu.memory_space<vmem>>, vector<512x512xbf16>
    %cst_7 = arith.constant dense<0.000000e+00> : vector<8x512xf32>
    %20 = tpu.matmul %18, %19, %cst_7 {dimension_numbers = #tpu.dot_dimension_numbers<[1], [0], [0], [1], [0, 0, 1, 1], [], []>} : vector<8x512xbf16>, vector<512x512xbf16>, vector<8x512xf32> -> vector<8x512xf32>
    %c0_8 = arith.constant 0 : index
    %c0_9 = arith.constant 0 : index
    %21 = vector.load %arg5[%c0_8, %c0_9] : memref<1x512xf32, #tpu.memory_space<vmem>>, vector<1x512xf32>
    %22 = vector.broadcast %21 : vector<1x512xf32> to vector<8x512xf32>
    %23 = arith.addf %20, %22 : vector<8x512xf32>
    %cst_10 = arith.constant 0.000000e+00 : f32
    %24 = vector.broadcast %cst_10 : f32 to vector<8x512xf32>
    %25 = arith.maximumf %23, %24 : vector<8x512xf32>
    %26 = arith.truncf %25 : vector<8x512xf32> to vector<8x512xbf16>
    %c0_11 = arith.constant 0 : index
    %c0_12 = arith.constant 0 : index
    %27 = vector.load %arg6[%c0_11, %c0_12] : memref<512x2xbf16, #tpu.memory_space<vmem>>, vector<512x2xbf16>
    %cst_13 = arith.constant dense<0.000000e+00> : vector<8x2xf32>
    %28 = tpu.matmul %26, %27, %cst_13 {dimension_numbers = #tpu.dot_dimension_numbers<[1], [0], [0], [1], [0, 0, 1, 1], [], []>} : vector<8x512xbf16>, vector<512x2xbf16>, vector<8x2xf32> -> vector<8x2xf32>
    %c0_14 = arith.constant 0 : index
    %c0_15 = arith.constant 0 : index
    %29 = vector.load %arg7[%c0_14, %c0_15] : memref<1x2xf32, #tpu.memory_space<vmem>>, vector<1x2xf32>
    %30 = vector.broadcast %29 : vector<1x2xf32> to vector<8x2xf32>
    %31 = arith.addf %28, %30 : vector<8x2xf32>
    %c0_16 = arith.constant 0 : index
    %c0_17 = arith.constant 0 : index
    %32 = vector.load %arg8[%c0_16, %c0_17] : memref<8x2xf32, #tpu.memory_space<vmem>>, vector<8x2xf32>
    tpu.vector_store %arg8[%c0_16, %c0_17], %31 {strides = array<i32>} : memref<8x2xf32, #tpu.memory_space<vmem>>, vector<8x2xf32>,
    return
  }
  func.func @transform_0(%arg0: i32) -> (i32, i32) {
    %c0_i32 = arith.constant 0 : i32
    %c0_i32_0 = arith.constant 0 : i32
    return %arg0, %c0_i32 : i32, i32
  }
  func.func @transform_1(%arg0: i32) -> (i32, i32) {
    %c0_i32 = arith.constant 0 : i32
    %c0_i32_0 = arith.constant 0 : i32
    %c0_i32_1 = arith.constant 0 : i32
    return %c0_i32, %c0_i32_0 : i32, i32
  }
  func.func @transform_2(%arg0: i32) -> (i32, i32) {
    %c0_i32 = arith.constant 0 : i32
    %c0_i32_0 = arith.constant 0 : i32
    %c0_i32_1 = arith.constant 0 : i32
    return %c0_i32, %c0_i32_0 : i32, i32
  }
  func.func @transform_3(%arg0: i32) -> (i32, i32) {
    %c0_i32 = arith.constant 0 : i32
    %c0_i32_0 = arith.constant 0 : i32
    %c0_i32_1 = arith.constant 0 : i32
    return %c0_i32, %c0_i32_0 : i32, i32
  }
  func.func @transform_4(%arg0: i32) -> (i32, i32) {
    %c0_i32 = arith.constant 0 : i32
    %c0_i32_0 = arith.constant 0 : i32
    %c0_i32_1 = arith.constant 0 : i32
    return %c0_i32, %c0_i32_0 : i32, i32
  }
  func.func @transform_5(%arg0: i32) -> (i32, i32) {
    %c0_i32 = arith.constant 0 : i32
    %c0_i32_0 = arith.constant 0 : i32
    %c0_i32_1 = arith.constant 0 : i32
    return %c0_i32, %c0_i32_0 : i32, i32
  }
  func.func @transform_6(%arg0: i32) -> (i32, i32) {
    %c0_i32 = arith.constant 0 : i32
    %c0_i32_0 = arith.constant 0 : i32
    %c0_i32_1 = arith.constant 0 : i32
    return %c0_i32, %c0_i32_0 : i32, i32
  }
  func.func @transform_7(%arg0: i32) -> (i32, i32) {
    %c0_i32 = arith.constant 0 : i32
    %c0_i32_0 = arith.constant 0 : i32
    return %arg0, %c0_i32 : i32, i32
  }
}

</mosaic_0001>

<llo_original>
// kernel: tpu_custom_call.1
$region0: #{tpu_custom_call.1}
  #allocation0 [shape = 'u32[]', space=smem, size = 0x4, offset = 0x4, fixed_abs, tag = 'smem constant byte address 0x4 - core index']
  #allocation1 [shape = 'u32[72,128]{1,0:T(1,128)}', space=vmem, size = 0x9000, scoped, tag = 'internal scratch']
  %s0 = inlined_call_operand.vmem [shape: f32[8,2], index: 0, kind: input, shape index: {}]
  %s1 = inlined_call_operand.vmem [shape: f32[2,512], index: 1, kind: input, shape index: {}]
  %s2 = inlined_call_operand.vmem [shape: f32[1,512], index: 2, kind: input, shape index: {}]
  %s3 = inlined_call_operand.hbm [shape: bf16[512,512], index: 3, kind: input, shape index: {}]
  %s4 = inlined_call_operand.vmem [shape: f32[1,512], index: 4, kind: input, shape index: {}]
  %s5 = inlined_call_operand.vmem [shape: bf16[512,2], index: 5, kind: input, shape index: {}]
  %s6 = inlined_call_operand.vmem [shape: f32[1,2], index: 6, kind: input, shape index: {}]
  %s7 = inlined_call_operand.vmem [shape: f32[8,2], index: 7, kind: output, shape index: {}]
  %s8 = sld [smem:[#allocation0]]
  $region42: #{tpu_custom_call.1} parent=0
    _
  %s10 = ssub.s32 1, %s8
  %s11 = scalar_select 0, %s10, %s8
  $region1: #{tpu_custom_call.1} parent=0
    #allocation2 [shape = 'u8[524288]{0}', space=vmem, size = 0x80000, scoped, tag = 'input window, operand 3, single buffered']
    #allocation3 [shape = 's32[1]{0}', space=sflag, size = 0x4, scoped, tag = 'scoped memory for tpu_custom_call.1']
    %12 = vsyncpa [#allocation3], 0
    // Predicated region
    $region2: #{tpu_custom_call.1} parent=1 // pred_check
      _
    $region3: #{tpu_custom_call.1} parent=1 // pred_check_branch
      %14 = sbr.rel (0) target = $region5
    $region4: #{tpu_custom_call.1} parent=1 // pred_region
      _
    $region5: #{tpu_custom_call.1} parent=1 // pred_fallthru
      _
    // Predicated region
    $region6: #{tpu_custom_call.1} parent=1 // pred_check
      _
    $region7: #{tpu_custom_call.1} parent=1 // pred_check_branch
      %16 = sbr.rel (0) target = $region9
    $region8: #{tpu_custom_call.1} parent=1 // pred_region
      _
    $region9: #{tpu_custom_call.1} parent=1 // pred_fallthru
      _
    // Predicated region
    $region10: #{tpu_custom_call.1} parent=1 // pred_check
      _
    $region11: #{tpu_custom_call.1} parent=1 // pred_check_branch
      %18 = sbr.rel (0) target = $region13
    $region12: #{tpu_custom_call.1} parent=1 // pred_region
      _
    $region13: #{tpu_custom_call.1} parent=1 // pred_fallthru
      _
    // Predicated region
    $region14: #{tpu_custom_call.1} parent=1 // pred_check
      _
    $region15: #{tpu_custom_call.1} parent=1 // pred_check_branch
      %20 = sbr.rel (0) target = $region17
    $region16: #{tpu_custom_call.1} parent=1 // pred_region
      %22 = vsyncadd [#allocation3], 0
      %s23 = sshll.u32 %s3, 4
      %s24 = int_to_ptr.hbm [resolvable:$true] %s23
      %s25 = sshll.u32 [#allocation2], 4
      %s26 = int_to_ptr.vmem [resolvable:$true] %s25
      %31 = dma.hbm_to_vmem [thread:$0]  %s24, 16384, %s26, [#allocation3], 256, 256, 16
    $region17: #{tpu_custom_call.1} parent=1 // pred_fallthru
      _
    // Predicated region
    $region18: #{tpu_custom_call.1} parent=1 // pred_check
      _
    $region19: #{tpu_custom_call.1} parent=1 // pred_check_branch
      %33 = sbr.rel (0) target = $region21
    $region20: #{tpu_custom_call.1} parent=1 // pred_region
      _
    $region21: #{tpu_custom_call.1} parent=1 // pred_fallthru
      _
    // Predicated region
    $region22: #{tpu_custom_call.1} parent=1 // pred_check
      _
    $region23: #{tpu_custom_call.1} parent=1 // pred_check_branch
      %35 = sbr.rel (0) target = $region25
    $region24: #{tpu_custom_call.1} parent=1 // pred_region
      _
    $region25: #{tpu_custom_call.1} parent=1 // pred_fallthru
      _
    // Predicated region
    $region26: #{tpu_custom_call.1} parent=1 // pred_check
      _
    $region27: #{tpu_custom_call.1} parent=1 // pred_check_branch
      %37 = sbr.rel (0) target = $region29
    $region28: #{tpu_custom_call.1} parent=1 // pred_region
      _
    $region29: #{tpu_custom_call.1} parent=1 // pred_fallthru
      _
    // Predicated region
    $region30: #{tpu_custom_call.1} parent=1 // pred_check
      _
    $region31: #{tpu_custom_call.1} parent=1 // pred_check_branch
      %39 = sbr.rel (0) target = $region33
    $region32: #{tpu_custom_call.1} parent=1 // pred_region
      %41 = dma.done [#allocation3], 16384
    $region33: #{tpu_custom_call.1} parent=1 // pred_fallthru
      _
    %v42 = vld [vmem:[%s0] sm:$0xff]
    %v43 = vld [vmem:[%s1] sm:$0xff]
    %45 = vset.pattern.permute.xlu0 0
    %46 = vperm.xlu0 %45, %v42
    %v47 = vpop.permute.xlu0 %46
    %v50 = vperm.slane %v43, 0
    %v51 = vperm.slane %v43, 2
    %v52 = vperm.slane %v43, 4
    %v53 = vperm.slane %v43, 6
    %v58 = vperm.slane %v50, 0
    %v59 = vperm.slane %v51, 0
    %v60 = vperm.slane %v52, 0
    %v61 = vperm.slane %v53, 0
    %v62 = vmul.f32 %v47, %v58
    %v63 = vmul.f32 %v47, %v59
    %v64 = vmul.f32 %v47, %v60
    %v65 = vmul.f32 %v47, %v61
    %66 = vset.pattern.permute.xlu0 1
    %67 = vperm.xlu0 %66, %v42
    %v68 = vpop.permute.xlu0 %67
    %v70 = vperm.slane %v43, 1
    %v71 = vperm.slane %v43, 3
    %v72 = vperm.slane %v43, 5
    %v73 = vperm.slane %v43, 7
    %v78 = vperm.slane %v70, 1
    %v79 = vperm.slane %v71, 1
    %v80 = vperm.slane %v72, 1
    %v81 = vperm.slane %v73, 1
    %v82 = vmul.f32 %v68, %v78
    %v83 = vmul.f32 %v68, %v79
    %v84 = vmul.f32 %v68, %v80
    %v85 = vmul.f32 %v68, %v81
    %v86 = vadd.f32 %v62, %v82
    %v87 = vadd.f32 %v63, %v83
    %v88 = vadd.f32 %v64, %v84
    %v89 = vadd.f32 %v65, %v85
    %v90 = vld [vmem:[%s2] sm:$0xf]
    %v92 = vperm.slane %v90, 0
    %v93 = vperm.slane %v90, 1
    %v94 = vperm.slane %v90, 2
    %v95 = vperm.slane %v90, 3
    %v100 = vadd.f32 %v86, %v92
    %v101 = vadd.f32 %v87, %v93
    %v102 = vadd.f32 %v88, %v94
    %v103 = vadd.f32 %v89, %v95
    %v104 = vmax.f32 %v100, 0.0
    %v105 = vmax.f32 %v101, 0.0
    %v106 = vmax.f32 %v102, 0.0
    %v107 = vmax.f32 %v103, 0.0
    %v108 = vpack.c.bf16 %v104, %v104
    %v109 = vpack.c.bf16 %v105, %v105
    %v110 = vpack.c.bf16 %v106, %v106
    %v111 = vpack.c.bf16 %v107, %v107
    %v112 = vld [vmem:[#allocation2] sm:$0xff]
    %v113 = vld [vmem:[#allocation2 + $0x8] sm:$0xff]
    %v114 = vld [vmem:[#allocation2 + $0x10] sm:$0xff]
    %v115 = vld [vmem:[#allocation2 + $0x18] sm:$0xff]
    %v116 = vld [vmem:[#allocation2 + $0x20] sm:$0xff]
    %v117 = vld [vmem:[#allocation2 + $0x28] sm:$0xff]
    %v118 = vld [vmem:[#allocation2 + $0x30] sm:$0xff]
    %v119 = vld [vmem:[#allocation2 + $0x38] sm:$0xff]
    %v120 = vld [vmem:[#allocation2 + $0x40] sm:$0xff]
    %v121 = vld [vmem:[#allocation2 + $0x48] sm:$0xff]
    %v122 = vld [vmem:[#allocation2 + $0x50] sm:$0xff]
    %v123 = vld [vmem:[#allocation2 + $0x58] sm:$0xff]
    %v124 = vld [vmem:[#allocation2 + $0x60] sm:$0xff]
    %v125 = vld [vmem:[#allocation2 + $0x68] sm:$0xff]
    %v126 = vld [vmem:[#allocation2 + $0x70] sm:$0xff]
    %v127 = vld [vmem:[#allocation2 + $0x78] sm:$0xff]
    %v128 = vld [vmem:[#allocation2 + $0x80] sm:$0xff]
    %v129 = vld [vmem:[#allocation2 + $0x88] sm:$0xff]
    %v130 = vld [vmem:[#allocation2 + $0x90] sm:$0xff]
    %v131 = vld [vmem:[#allocation2 + $0x98] sm:$0xff]
    %v132 = vld [vmem:[#allocation2 + $0xa0] sm:$0xff]
    %v133 = vld [vmem:[#allocation2 + $0xa8] sm:$0xff]
    %v134 = vld [vmem:[#allocation2 + $0xb0] sm:$0xff]
    %v135 = vld [vmem:[#allocation2 + $0xb8] sm:$0xff]
    %v136 = vld [vmem:[#allocation2 + $0xc0] sm:$0xff]
    %v137 = vld [vmem:[#allocation2 + $0xc8] sm:$0xff]
    %v138 = vld [vmem:[#allocation2 + $0xd0] sm:$0xff]
    %v139 = vld [vmem:[#allocation2 + $0xd8] sm:$0xff]
    %v140 = vld [vmem:[#allocation2 + $0xe0] sm:$0xff]
    %v141 = vld [vmem:[#allocation2 + $0xe8] sm:$0xff]
    %v142 = vld [vmem:[#allocation2 + $0xf0] sm:$0xff]
    %v143 = vld [vmem:[#allocation2 + $0xf8] sm:$0xff]
    %v144 = vld [vmem:[#allocation2 + $0x100] sm:$0xff]
    %v145 = vld [vmem:[#allocation2 + $0x108] sm:$0xff]
    %v146 = vld [vmem:[#allocation2 + $0x110] sm:$0xff]
    %v147 = vld [vmem:[#allocation2 + $0x118] sm:$0xff]
    %v148 = vld [vmem:[#allocation2 + $0x120] sm:$0xff]
    %v149 = vld [vmem:[#allocation2 + $0x128] sm:$0xff]
    %v150 = vld [vmem:[#allocation2 + $0x130] sm:$0xff]
    %v151 = vld [vmem:[#allocation2 + $0x138] sm:$0xff]
    %v152 = vld [vmem:[#allocation2 + $0x140] sm:$0xff]
    %v153 = vld [vmem:[#allocation2 + $0x148] sm:$0xff]
    %v154 = vld [vmem:[#allocation2 + $0x150] sm:$0xff]
    %v155 = vld [vmem:[#allocation2 + $0x158] sm:$0xff]
    %v156 = vld [vmem:[#allocation2 + $0x160] sm:$0xff]
    %v157 = vld [vmem:[#allocation2 + $0x168] sm:$0xff]
    %v158 = vld [vmem:[#allocation2 + $0x170] sm:$0xff]
    %v159 = vld [vmem:[#allocation2 + $0x178] sm:$0xff]
    %v160 = vld [vmem:[#allocation2 + $0x180] sm:$0xff]
    %v161 = vld [vmem:[#allocation2 + $0x188] sm:$0xff]
    %v162 = vld [vmem:[#allocation2 + $0x190] sm:$0xff]
    %v163 = vld [vmem:[#allocation2 + $0x198] sm:$0xff]
    %v164 = vld [vmem:[#allocation2 + $0x1a0] sm:$0xff]
    %v165 = vld [vmem:[#allocation2 + $0x1a8] sm:$0xff]
    %v166 = vld [vmem:[#allocation2 + $0x1b0] sm:$0xff]
    %v167 = vld [vmem:[#allocation2 + $0x1b8] sm:$0xff]
    %v168 = vld [vmem:[#allocation2 + $0x1c0] sm:$0xff]
    %v169 = vld [vmem:[#allocation2 + $0x1c8] sm:$0xff]
    %v170 = vld [vmem:[#allocation2 + $0x1d0] sm:$0xff]
    %v171 = vld [vmem:[#allocation2 + $0x1d8] sm:$0xff]
    %v172 = vld [vmem:[#allocation2 + $0x1e0] sm:$0xff]
    %v173 = vld [vmem:[#allocation2 + $0x1e8] sm:$0xff]
    %v174 = vld [vmem:[#allocation2 + $0x1f0] sm:$0xff]
    %v175 = vld [vmem:[#allocation2 + $0x1f8] sm:$0xff]
    %v176 = vld [vmem:[#allocation2 + $0x200] sm:$0xff]
    %v177 = vld [vmem:[#allocation2 + $0x208] sm:$0xff]
    %v178 = vld [vmem:[#allocation2 + $0x210] sm:$0xff]
    %v179 = vld [vmem:[#allocation2 + $0x218] sm:$0xff]
    %v180 = vld [vmem:[#allocation2 + $0x220] sm:$0xff]
    %v181 = vld [vmem:[#allocation2 + $0x228] sm:$0xff]
    %v182 = vld [vmem:[#allocation2 + $0x230] sm:$0xff]
    %v183 = vld [vmem:[#allocation2 + $0x238] sm:$0xff]
    %v184 = vld [vmem:[#allocation2 + $0x240] sm:$0xff]
    %v185 = vld [vmem:[#allocation2 + $0x248] sm:$0xff]
    %v186 = vld [vmem:[#allocation2 + $0x250] sm:$0xff]
    %v187 = vld [vmem:[#allocation2 + $0x258] sm:$0xff]
    %v188 = vld [vmem:[#allocation2 + $0x260] sm:$0xff]
    %v189 = vld [vmem:[#allocation2 + $0x268] sm:$0xff]
    %v190 = vld [vmem:[#allocation2 + $0x270] sm:$0xff]
    %v191 = vld [vmem:[#allocation2 + $0x278] sm:$0xff]
    %v192 = vld [vmem:[#allocation2 + $0x280] sm:$0xff]
    %v193 = vld [vmem:[#allocation2 + $0x288] sm:$0xff]
    %v194 = vld [vmem:[#allocation2 + $0x290] sm:$0xff]
    %v195 = vld [vmem:[#allocation2 + $0x298] sm:$0xff]
    %v196 = vld [vmem:[#allocation2 + $0x2a0] sm:$0xff]
    %v197 = vld [vmem:[#allocation2 + $0x2a8] sm:$0xff]
    %v198 = vld [vmem:[#allocation2 + $0x2b0] sm:$0xff]
    %v199 = vld [vmem:[#allocation2 + $0x2b8] sm:$0xff]
    %v200 = vld [vmem:[#allocation2 + $0x2c0] sm:$0xff]
    %v201 = vld [vmem:[#allocation2 + $0x2c8] sm:$0xff]
    %v202 = vld [vmem:[#allocation2 + $0x2d0] sm:$0xff]
    %v203 = vld [vmem:[#allocation2 + $0x2d8] sm:$0xff]
    %v204 = vld [vmem:[#allocation2 + $0x2e0] sm:$0xff]
    %v205 = vld [vmem:[#allocation2 + $0x2e8] sm:$0xff]
    %v206 = vld [vmem:[#allocation2 + $0x2f0] sm:$0xff]
    %v207 = vld [vmem:[#allocation2 + $0x2f8] sm:$0xff]
    %v208 = vld [vmem:[#allocation2 + $0x300] sm:$0xff]
    %v209 = vld [vmem:[#allocation2 + $0x308] sm:$0xff]
    %v210 = vld [vmem:[#allocation2 + $0x310] sm:$0xff]
    %v211 = vld [vmem:[#allocation2 + $0x318] sm:$0xff]
    %v212 = vld [vmem:[#allocation2 + $0x320] sm:$0xff]
    %v213 = vld [vmem:[#allocation2 + $0x328] sm:$0xff]
    %v214 = vld [vmem:[#allocation2 + $0x330] sm:$0xff]
    %v215 = vld [vmem:[#allocation2 + $0x338] sm:$0xff]
    %v216 = vld [vmem:[#allocation2 + $0x340] sm:$0xff]
    %v217 = vld [vmem:[#allocation2 + $0x348] sm:$0xff]
    %v218 = vld [vmem:[#allocation2 + $0x350] sm:$0xff]
    %v219 = vld [vmem:[#allocation2 + $0x358] sm:$0xff]
    %v220 = vld [vmem:[#allocation2 + $0x360] sm:$0xff]
    %v221 = vld [vmem:[#allocation2 + $0x368] sm:$0xff]
    %v222 = vld [vmem:[#allocation2 + $0x370] sm:$0xff]
    %v223 = vld [vmem:[#allocation2 + $0x378] sm:$0xff]
    %v224 = vld [vmem:[#allocation2 + $0x380] sm:$0xff]
    %v225 = vld [vmem:[#allocation2 + $0x388] sm:$0xff]
    %v226 = vld [vmem:[#allocation2 + $0x390] sm:$0xff]
    %v227 = vld [vmem:[#allocation2 + $0x398] sm:$0xff]
    %v228 = vld [vmem:[#allocation2 + $0x3a0] sm:$0xff]
    %v229 = vld [vmem:[#allocation2 + $0x3a8] sm:$0xff]
    %v230 = vld [vmem:[#allocation2 + $0x3b0] sm:$0xff]
    %v231 = vld [vmem:[#allocation2 + $0x3b8] sm:$0xff]
    %v232 = vld [vmem:[#allocation2 + $0x3c0] sm:$0xff]
    %v233 = vld [vmem:[#allocation2 + $0x3c8] sm:$0xff]
    %v234 = vld [vmem:[#allocation2 + $0x3d0] sm:$0xff]
    %v235 = vld [vmem:[#allocation2 + $0x3d8] sm:$0xff]
    %v236 = vld [vmem:[#allocation2 + $0x3e0] sm:$0xff]
    %v237 = vld [vmem:[#allocation2 + $0x3e8] sm:$0xff]
    %v238 = vld [vmem:[#allocation2 + $0x3f0] sm:$0xff]
    %v239 = vld [vmem:[#allocation2 + $0x3f8] sm:$0xff]
    %v240 = vld [vmem:[%s4] sm:$0xf]
    %v242 = vperm.slane %v240, 0
    %v243 = vperm.slane %v240, 1
    %v244 = vperm.slane %v240, 2
    %v245 = vperm.slane %v240, 3
    %v378 = vunpack.c.l.b16 %v112
    %v379 = vunpack.c.h.b16 %v112
    %v380 = vunpack.c.l.b16 %v113
    %v381 = vunpack.c.h.b16 %v113
    %v382 = vunpack.c.l.b16 %v114
    %v383 = vunpack.c.h.b16 %v114
    %v384 = vunpack.c.l.b16 %v115
    %v385 = vunpack.c.h.b16 %v115
    %v386 = vunpack.c.l.b16 %v116
    %v387 = vunpack.c.h.b16 %v116
    %v388 = vunpack.c.l.b16 %v117
    %v389 = vunpack.c.h.b16 %v117
    %v390 = vunpack.c.l.b16 %v118
    %v391 = vunpack.c.h.b16 %v118
    %v392 = vunpack.c.l.b16 %v119
    %v393 = vunpack.c.h.b16 %v119
    %v394 = vunpack.c.l.b16 %v120
    %v395 = vunpack.c.h.b16 %v120
    %v396 = vunpack.c.l.b16 %v121
    %v397 = vunpack.c.h.b16 %v121
    %v398 = vunpack.c.l.b16 %v122
    %v399 = vunpack.c.h.b16 %v122
    %v400 = vunpack.c.l.b16 %v123
    %v401 = vunpack.c.h.b16 %v123
    %v402 = vunpack.c.l.b16 %v124
    %v403 = vunpack.c.h.b16 %v124
    %v404 = vunpack.c.l.b16 %v125
    %v405 = vunpack.c.h.b16 %v125
    %v406 = vunpack.c.l.b16 %v126
    %v407 = vunpack.c.h.b16 %v126
    %v408 = vunpack.c.l.b16 %v127
    %v409 = vunpack.c.h.b16 %v127
    %v410 = vunpack.c.l.b16 %v128
    %v411 = vunpack.c.h.b16 %v128
    %v412 = vunpack.c.l.b16 %v129
    %v413 = vunpack.c.h.b16 %v129
    %v414 = vunpack.c.l.b16 %v130
    %v415 = vunpack.c.h.b16 %v130
    %v416 = vunpack.c.l.b16 %v131
    %v417 = vunpack.c.h.b16 %v131
    %v418 = vunpack.c.l.b16 %v132
    %v419 = vunpack.c.h.b16 %v132
    %v420 = vunpack.c.l.b16 %v133
    %v421 = vunpack.c.h.b16 %v133
    %v422 = vunpack.c.l.b16 %v134
    %v423 = vunpack.c.h.b16 %v134
    %v424 = vunpack.c.l.b16 %v135
    %v425 = vunpack.c.h.b16 %v135
    %v426 = vunpack.c.l.b16 %v136
    %v427 = vunpack.c.h.b16 %v136
    %v428 = vunpack.c.l.b16 %v137
    %v429 = vunpack.c.h.b16 %v137
    %v430 = vunpack.c.l.b16 %v138
    %v431 = vunpack.c.h.b16 %v138
    %v432 = vunpack.c.l.b16 %v139
    %v433 = vunpack.c.h.b16 %v139
    %v434 = vunpack.c.l.b16 %v140
    %v435 = vunpack.c.h.b16 %v140
    %v436 = vunpack.c.l.b16 %v141
    %v437 = vunpack.c.h.b16 %v141
    %v438 = vunpack.c.l.b16 %v142
    %v439 = vunpack.c.h.b16 %v142
    %v440 = vunpack.c.l.b16 %v143
    %v441 = vunpack.c.h.b16 %v143
    %v442 = vunpack.c.l.b16 %v144
    %v443 = vunpack.c.h.b16 %v144
    %v444 = vunpack.c.l.b16 %v145
    %v445 = vunpack.c.h.b16 %v145
    %v446 = vunpack.c.l.b16 %v146
    %v447 = vunpack.c.h.b16 %v146
    %v448 = vunpack.c.l.b16 %v147
    %v449 = vunpack.c.h.b16 %v147
    %v450 = vunpack.c.l.b16 %v148
    %v451 = vunpack.c.h.b16 %v148
    %v452 = vunpack.c.l.b16 %v149
    %v453 = vunpack.c.h.b16 %v149
    %v454 = vunpack.c.l.b16 %v150
    %v455 = vunpack.c.h.b16 %v150
    %v456 = vunpack.c.l.b16 %v151
    %v457 = vunpack.c.h.b16 %v151
    %v458 = vunpack.c.l.b16 %v152
    %v459 = vunpack.c.h.b16 %v152
    %v460 = vunpack.c.l.b16 %v153
    %v461 = vunpack.c.h.b16 %v153
    %v462 = vunpack.c.l.b16 %v154
    %v463 = vunpack.c.h.b16 %v154
    %v464 = vunpack.c.l.b16 %v155
    %v465 = vunpack.c.h.b16 %v155
    %v466 = vunpack.c.l.b16 %v156
    %v467 = vunpack.c.h.b16 %v156
    %v468 = vunpack.c.l.b16 %v157
    %v469 = vunpack.c.h.b16 %v157
    %v470 = vunpack.c.l.b16 %v158
    %v471 = vunpack.c.h.b16 %v158
    %v472 = vunpack.c.l.b16 %v159
    %v473 = vunpack.c.h.b16 %v159
    %v474 = vunpack.c.l.b16 %v160
    %v475 = vunpack.c.h.b16 %v160
    %v476 = vunpack.c.l.b16 %v161
    %v477 = vunpack.c.h.b16 %v161
    %v478 = vunpack.c.l.b16 %v162
    %v479 = vunpack.c.h.b16 %v162
    %v480 = vunpack.c.l.b16 %v163
    %v481 = vunpack.c.h.b16 %v163
    %v482 = vunpack.c.l.b16 %v164
    %v483 = vunpack.c.h.b16 %v164
    %v484 = vunpack.c.l.b16 %v165
    %v485 = vunpack.c.h.b16 %v165
    %v486 = vunpack.c.l.b16 %v166
    %v487 = vunpack.c.h.b16 %v166
    %v488 = vunpack.c.l.b16 %v167
    %v489 = vunpack.c.h.b16 %v167
    %v490 = vunpack.c.l.b16 %v168
    %v491 = vunpack.c.h.b16 %v168
    %v492 = vunpack.c.l.b16 %v169
    %v493 = vunpack.c.h.b16 %v169
    %v494 = vunpack.c.l.b16 %v170
    %v495 = vunpack.c.h.b16 %v170
    %v496 = vunpack.c.l.b16 %v171
    %v497 = vunpack.c.h.b16 %v171
    %v498 = vunpack.c.l.b16 %v172
    %v499 = vunpack.c.h.b16 %v172
    %v500 = vunpack.c.l.b16 %v173
    %v501 = vunpack.c.h.b16 %v173
    %v502 = vunpack.c.l.b16 %v174
    %v503 = vunpack.c.h.b16 %v174
    %v504 = vunpack.c.l.b16 %v175
    %v505 = vunpack.c.h.b16 %v175
    %v506 = vunpack.c.l.b16 %v176
    %v507 = vunpack.c.h.b16 %v176
    %v508 = vunpack.c.l.b16 %v177
    %v509 = vunpack.c.h.b16 %v177
    %v510 = vunpack.c.l.b16 %v178
    %v511 = vunpack.c.h.b16 %v178
    %v512 = vunpack.c.l.b16 %v179
    %v513 = vunpack.c.h.b16 %v179
    %v514 = vunpack.c.l.b16 %v180
    %v515 = vunpack.c.h.b16 %v180
    %v516 = vunpack.c.l.b16 %v181
    %v517 = vunpack.c.h.b16 %v181
    %v518 = vunpack.c.l.b16 %v182
    %v519 = vunpack.c.h.b16 %v182
    %v520 = vunpack.c.l.b16 %v183
    %v521 = vunpack.c.h.b16 %v183
    %v522 = vunpack.c.l.b16 %v184
    %v523 = vunpack.c.h.b16 %v184
    %v524 = vunpack.c.l.b16 %v185
    %v525 = vunpack.c.h.b16 %v185
    %v526 = vunpack.c.l.b16 %v186
    %v527 = vunpack.c.h.b16 %v186
    %v528 = vunpack.c.l.b16 %v187
    %v529 = vunpack.c.h.b16 %v187
    %v530 = vunpack.c.l.b16 %v188
    %v531 = vunpack.c.h.b16 %v188
    %v532 = vunpack.c.l.b16 %v189
    %v533 = vunpack.c.h.b16 %v189
    %v534 = vunpack.c.l.b16 %v190
    %v535 = vunpack.c.h.b16 %v190
    %v536 = vunpack.c.l.b16 %v191
    %v537 = vunpack.c.h.b16 %v191
    %v538 = vunpack.c.l.b16 %v192
    %v539 = vunpack.c.h.b16 %v192
    %v540 = vunpack.c.l.b16 %v193
    %v541 = vunpack.c.h.b16 %v193
    %v542 = vunpack.c.l.b16 %v194
    %v543 = vunpack.c.h.b16 %v194
    %v544 = vunpack.c.l.b16 %v195
    %v545 = vunpack.c.h.b16 %v195
    %v546 = vunpack.c.l.b16 %v196
    %v547 = vunpack.c.h.b16 %v196
    %v548 = vunpack.c.l.b16 %v197
    %v549 = vunpack.c.h.b16 %v197
    %v550 = vunpack.c.l.b16 %v198
    %v551 = vunpack.c.h.b16 %v198
    %v552 = vunpack.c.l.b16 %v199
    %v553 = vunpack.c.h.b16 %v199
    %v554 = vunpack.c.l.b16 %v200
    %v555 = vunpack.c.h.b16 %v200
    %v556 = vunpack.c.l.b16 %v201
    %v557 = vunpack.c.h.b16 %v201
    %v558 = vunpack.c.l.b16 %v202
    %v559 = vunpack.c.h.b16 %v202
    %v560 = vunpack.c.l.b16 %v203
    %v561 = vunpack.c.h.b16 %v203
    %v562 = vunpack.c.l.b16 %v204
    %v563 = vunpack.c.h.b16 %v204
    %v564 = vunpack.c.l.b16 %v205
    %v565 = vunpack.c.h.b16 %v205
    %v566 = vunpack.c.l.b16 %v206
    %v567 = vunpack.c.h.b16 %v206
    %v568 = vunpack.c.l.b16 %v207
    %v569 = vunpack.c.h.b16 %v207
    %v570 = vunpack.c.l.b16 %v208
    %v571 = vunpack.c.h.b16 %v208
    %v572 = vunpack.c.l.b16 %v209
    %v573 = vunpack.c.h.b16 %v209
    %v574 = vunpack.c.l.b16 %v210
    %v575 = vunpack.c.h.b16 %v210
    %v576 = vunpack.c.l.b16 %v211
    %v577 = vunpack.c.h.b16 %v211
    %v578 = vunpack.c.l.b16 %v212
    %v579 = vunpack.c.h.b16 %v212
    %v580 = vunpack.c.l.b16 %v213
    %v581 = vunpack.c.h.b16 %v213
    %v582 = vunpack.c.l.b16 %v214
    %v583 = vunpack.c.h.b16 %v214
    %v584 = vunpack.c.l.b16 %v215
    %v585 = vunpack.c.h.b16 %v215
    %v586 = vunpack.c.l.b16 %v216
    %v587 = vunpack.c.h.b16 %v216
    %v588 = vunpack.c.l.b16 %v217
    %v589 = vunpack.c.h.b16 %v217
    %v590 = vunpack.c.l.b16 %v218
    %v591 = vunpack.c.h.b16 %v218
    %v592 = vunpack.c.l.b16 %v219
    %v593 = vunpack.c.h.b16 %v219
    %v594 = vunpack.c.l.b16 %v220
    %v595 = vunpack.c.h.b16 %v220
    %v596 = vunpack.c.l.b16 %v221
    %v597 = vunpack.c.h.b16 %v221
    %v598 = vunpack.c.l.b16 %v222
    %v599 = vunpack.c.h.b16 %v222
    %v600 = vunpack.c.l.b16 %v223
    %v601 = vunpack.c.h.b16 %v223
    %v602 = vunpack.c.l.b16 %v224
    %v603 = vunpack.c.h.b16 %v224
    %v604 = vunpack.c.l.b16 %v225
    %v605 = vunpack.c.h.b16 %v225
    %v606 = vunpack.c.l.b16 %v226
    %v607 = vunpack.c.h.b16 %v226
    %v608 = vunpack.c.l.b16 %v227
    %v609 = vunpack.c.h.b16 %v227
    %v610 = vunpack.c.l.b16 %v228
    %v611 = vunpack.c.h.b16 %v228
    %v612 = vunpack.c.l.b16 %v229
    %v613 = vunpack.c.h.b16 %v229
    %v614 = vunpack.c.l.b16 %v230
    %v615 = vunpack.c.h.b16 %v230
    %v616 = vunpack.c.l.b16 %v231
    %v617 = vunpack.c.h.b16 %v231
    %v618 = vunpack.c.l.b16 %v232
    %v619 = vunpack.c.h.b16 %v232
    %v620 = vunpack.c.l.b16 %v233
    %v621 = vunpack.c.h.b16 %v233
    %v622 = vunpack.c.l.b16 %v234
    %v623 = vunpack.c.h.b16 %v234
    %v624 = vunpack.c.l.b16 %v235
    %v625 = vunpack.c.h.b16 %v235
    %v626 = vunpack.c.l.b16 %v236
    %v627 = vunpack.c.h.b16 %v236
    %v628 = vunpack.c.l.b16 %v237
    %v629 = vunpack.c.h.b16 %v237
    %v630 = vunpack.c.l.b16 %v238
    %v631 = vunpack.c.h.b16 %v238
    %v632 = vunpack.c.l.b16 %v239
    %v633 = vunpack.c.h.b16 %v239
    %v634 = vpack.c.b16 %v382, %v378
    %v635 = vpack.c.b16 %v383, %v379
    %v636 = vpack.c.b16 %v384, %v380
    %v637 = vpack.c.b16 %v385, %v381
    %v638 = vpack.c.b16 %v390, %v386
    %v639 = vpack.c.b16 %v391, %v387
    %v640 = vpack.c.b16 %v392, %v388
    %v641 = vpack.c.b16 %v393, %v389
    %v642 = vpack.c.b16 %v398, %v394
    %v643 = vpack.c.b16 %v399, %v395
    %v644 = vpack.c.b16 %v400, %v396
    %v645 = vpack.c.b16 %v401, %v397
    %v646 = vpack.c.b16 %v406, %v402
    %v647 = vpack.c.b16 %v407, %v403
    %v648 = vpack.c.b16 %v408, %v404
    %v649 = vpack.c.b16 %v409, %v405
    %v650 = vpack.c.b16 %v414, %v410
    %v651 = vpack.c.b16 %v415, %v411
    %v652 = vpack.c.b16 %v416, %v412
    %v653 = vpack.c.b16 %v417, %v413
    %v654 = vpack.c.b16 %v422, %v418
    %v655 = vpack.c.b16 %v423, %v419
    %v656 = vpack.c.b16 %v424, %v420
    %v657 = vpack.c.b16 %v425, %v421
    %v658 = vpack.c.b16 %v430, %v426
    %v659 = vpack.c.b16 %v431, %v427
    %v660 = vpack.c.b16 %v432, %v428
    %v661 = vpack.c.b16 %v433, %v429
    %v662 = vpack.c.b16 %v438, %v434
    %v663 = vpack.c.b16 %v439, %v435
    %v664 = vpack.c.b16 %v440, %v436
    %v665 = vpack.c.b16 %v441, %v437
    %v666 = vpack.c.b16 %v446, %v442
    %v667 = vpack.c.b16 %v447, %v443
    %v668 = vpack.c.b16 %v448, %v444
    %v669 = vpack.c.b16 %v449, %v445
    %v670 = vpack.c.b16 %v454, %v450
    %v671 = vpack.c.b16 %v455, %v451
    %v672 = vpack.c.b16 %v456, %v452
    %v673 = vpack.c.b16 %v457, %v453
    %v674 = vpack.c.b16 %v462, %v458
    %v675 = vpack.c.b16 %v463, %v459
    %v676 = vpack.c.b16 %v464, %v460
    %v677 = vpack.c.b16 %v465, %v461
    %v678 = vpack.c.b16 %v470, %v466
    %v679 = vpack.c.b16 %v471, %v467
    %v680 = vpack.c.b16 %v472, %v468
    %v681 = vpack.c.b16 %v473, %v469
    %v682 = vpack.c.b16 %v478, %v474
    %v683 = vpack.c.b16 %v479, %v475
    %v684 = vpack.c.b16 %v480, %v476
    %v685 = vpack.c.b16 %v481, %v477
    %v686 = vpack.c.b16 %v486, %v482
    %v687 = vpack.c.b16 %v487, %v483
    %v688 = vpack.c.b16 %v488, %v484
    %v689 = vpack.c.b16 %v489, %v485
    %v690 = vpack.c.b16 %v494, %v490
    %v691 = vpack.c.b16 %v495, %v491
    %v692 = vpack.c.b16 %v496, %v492
    %v693 = vpack.c.b16 %v497, %v493
    %v694 = vpack.c.b16 %v502, %v498
    %v695 = vpack.c.b16 %v503, %v499
    %v696 = vpack.c.b16 %v504, %v500
    %v697 = vpack.c.b16 %v505, %v501
    %v698 = vpack.c.b16 %v510, %v506
    %v699 = vpack.c.b16 %v511, %v507
    %v700 = vpack.c.b16 %v512, %v508
    %v701 = vpack.c.b16 %v513, %v509
    %v702 = vpack.c.b16 %v518, %v514
    %v703 = vpack.c.b16 %v519, %v515
    %v704 = vpack.c.b16 %v520, %v516
    %v705 = vpack.c.b16 %v521, %v517
    %v706 = vpack.c.b16 %v526, %v522
    %v707 = vpack.c.b16 %v527, %v523
    %v708 = vpack.c.b16 %v528, %v524
    %v709 = vpack.c.b16 %v529, %v525
    %v710 = vpack.c.b16 %v534, %v530
    %v711 = vpack.c.b16 %v535, %v531
    %v712 = vpack.c.b16 %v536, %v532
    %v713 = vpack.c.b16 %v537, %v533
    %v714 = vpack.c.b16 %v542, %v538
    %v715 = vpack.c.b16 %v543, %v539
    %v716 = vpack.c.b16 %v544, %v540
    %v717 = vpack.c.b16 %v545, %v541
    %v718 = vpack.c.b16 %v550, %v546
    %v719 = vpack.c.b16 %v551, %v547
    %v720 = vpack.c.b16 %v552, %v548
    %v721 = vpack.c.b16 %v553, %v549
    %v722 = vpack.c.b16 %v558, %v554
    %v723 = vpack.c.b16 %v559, %v555
    %v724 = vpack.c.b16 %v560, %v556
    %v725 = vpack.c.b16 %v561, %v557
    %v726 = vpack.c.b16 %v566, %v562
    %v727 = vpack.c.b16 %v567, %v563
    %v728 = vpack.c.b16 %v568, %v564
    %v729 = vpack.c.b16 %v569, %v565
    %v730 = vpack.c.b16 %v574, %v570
    %v731 = vpack.c.b16 %v575, %v571
    %v732 = vpack.c.b16 %v576, %v572
    %v733 = vpack.c.b16 %v577, %v573
    %v734 = vpack.c.b16 %v582, %v578
    %v735 = vpack.c.b16 %v583, %v579
    %v736 = vpack.c.b16 %v584, %v580
    %v737 = vpack.c.b16 %v585, %v581
    %v738 = vpack.c.b16 %v590, %v586
    %v739 = vpack.c.b16 %v591, %v587
    %v740 = vpack.c.b16 %v592, %v588
    %v741 = vpack.c.b16 %v593, %v589
    %v742 = vpack.c.b16 %v598, %v594
    %v743 = vpack.c.b16 %v599, %v595
    %v744 = vpack.c.b16 %v600, %v596
    %v745 = vpack.c.b16 %v601, %v597
    %v746 = vpack.c.b16 %v606, %v602
    %v747 = vpack.c.b16 %v607, %v603
    %v748 = vpack.c.b16 %v608, %v604
    %v749 = vpack.c.b16 %v609, %v605
    %v750 = vpack.c.b16 %v614, %v610
    %v751 = vpack.c.b16 %v615, %v611
    %v752 = vpack.c.b16 %v616, %v612
    %v753 = vpack.c.b16 %v617, %v613
    %v754 = vpack.c.b16 %v622, %v618
    %v755 = vpack.c.b16 %v623, %v619
    %v756 = vpack.c.b16 %v624, %v620
    %v757 = vpack.c.b16 %v625, %v621
    %v758 = vpack.c.b16 %v630, %v626
    %v759 = vpack.c.b16 %v631, %v627
    %v760 = vpack.c.b16 %v632, %v628
    %v761 = vpack.c.b16 %v633, %v629
    %890 = vmatpush.bf16.msra.mxu0 %v662
    %891 = vmatpush.bf16.msra.mxu0 %v658
    %892 = vmatpush.bf16.msra.mxu0 %v654
    %893 = vmatpush.bf16.msra.mxu0 %v650
    %894 = vmatpush.bf16.msra.mxu0 %v646
    %895 = vmatpush.bf16.msra.mxu0 %v642
    %896 = vmatpush.bf16.msra.mxu0 %v638
    %897 = vmatpush.bf16.msra.mxu0 %v634
    %898 = vmatmul.bf16.gmra.mxu0 %v108
    %v899 = vpop.f32.mrf.mxu0
    %v900 = vadd.f32 %v242, %v899
    %v901 = vpop.f32.mrf.mxu0
    %902 = vdwg.mxu0
    %903 = vmatpush.bf16.msra.mxu0 %v694
    %904 = vmatpush.bf16.msra.mxu0 %v690
    %905 = vmatpush.bf16.msra.mxu0 %v686
    %906 = vmatpush.bf16.msra.mxu0 %v682
    %907 = vmatpush.bf16.msra.mxu0 %v678
    %908 = vmatpush.bf16.msra.mxu0 %v674
    %909 = vmatpush.bf16.msra.mxu0 %v670
    %910 = vmatpush.bf16.msra.mxu0 %v666
    %911 = vmatmul.bf16.gmra.mxu0 %v109
    %v912 = vpop.f32.mrf.mxu0
    %v913 = vadd.f32 %v900, %v912
    %v914 = vpop.f32.mrf.mxu0
    %915 = vdwg.mxu0
    %916 = vmatpush.bf16.msra.mxu0 %v726
    %917 = vmatpush.bf16.msra.mxu0 %v722
    %918 = vmatpush.bf16.msra.mxu0 %v718
    %919 = vmatpush.bf16.msra.mxu0 %v714
    %920 = vmatpush.bf16.msra.mxu0 %v710
    %921 = vmatpush.bf16.msra.mxu0 %v706
    %922 = vmatpush.bf16.msra.mxu0 %v702
    %923 = vmatpush.bf16.msra.mxu0 %v698
    %924 = vmatmul.bf16.gmra.mxu0 %v110
    %v925 = vpop.f32.mrf.mxu0
    %v926 = vadd.f32 %v913, %v925
    %v927 = vpop.f32.mrf.mxu0
    %928 = vdwg.mxu0
    %929 = vmatpush.bf16.msra.mxu0 %v758
    %930 = vmatpush.bf16.msra.mxu0 %v754
    %931 = vmatpush.bf16.msra.mxu0 %v750
    %932 = vmatpush.bf16.msra.mxu0 %v746
    %933 = vmatpush.bf16.msra.mxu0 %v742
    %934 = vmatpush.bf16.msra.mxu0 %v738
    %935 = vmatpush.bf16.msra.mxu0 %v734
    %936 = vmatpush.bf16.msra.mxu0 %v730
    %937 = vmatmul.bf16.gmra.mxu0 %v111
    %v938 = vpop.f32.mrf.mxu0
    %v939 = vadd.f32 %v926, %v938
    %v940 = vpop.f32.mrf.mxu0
    %941 = vdwg.mxu0
    %942 = vmatpush.bf16.msra.mxu0 %v663
    %943 = vmatpush.bf16.msra.mxu0 %v659
    %944 = vmatpush.bf16.msra.mxu0 %v655
    %945 = vmatpush.bf16.msra.mxu0 %v651
    %946 = vmatpush.bf16.msra.mxu0 %v647
    %947 = vmatpush.bf16.msra.mxu0 %v643
    %948 = vmatpush.bf16.msra.mxu0 %v639
    %949 = vmatpush.bf16.msra.mxu0 %v635
    %950 = vmatmul.bf16.gmra.mxu0 %v108
    %v951 = vpop.f32.mrf.mxu0
    %v952 = vadd.f32 %v243, %v951
    %v953 = vpop.f32.mrf.mxu0
    %954 = vdwg.mxu0
    %955 = vmatpush.bf16.msra.mxu0 %v695
    %956 = vmatpush.bf16.msra.mxu0 %v691
    %957 = vmatpush.bf16.msra.mxu0 %v687
    %958 = vmatpush.bf16.msra.mxu0 %v683
    %959 = vmatpush.bf16.msra.mxu0 %v679
    %960 = vmatpush.bf16.msra.mxu0 %v675
    %961 = vmatpush.bf16.msra.mxu0 %v671
    %962 = vmatpush.bf16.msra.mxu0 %v667
    %963 = vmatmul.bf16.gmra.mxu0 %v109
    %v964 = vpop.f32.mrf.mxu0
    %v965 = vadd.f32 %v952, %v964
    %v966 = vpop.f32.mrf.mxu0
    %967 = vdwg.mxu0
    %968 = vmatpush.bf16.msra.mxu0 %v727
    %969 = vmatpush.bf16.msra.mxu0 %v723
    %970 = vmatpush.bf16.msra.mxu0 %v719
    %971 = vmatpush.bf16.msra.mxu0 %v715
    %972 = vmatpush.bf16.msra.mxu0 %v711
    %973 = vmatpush.bf16.msra.mxu0 %v707
    %974 = vmatpush.bf16.msra.mxu0 %v703
    %975 = vmatpush.bf16.msra.mxu0 %v699
    %976 = vmatmul.bf16.gmra.mxu0 %v110
    %v977 = vpop.f32.mrf.mxu0
    %v978 = vadd.f32 %v965, %v977
    %v979 = vpop.f32.mrf.mxu0
    %980 = vdwg.mxu0
    %981 = vmatpush.bf16.msra.mxu0 %v759
    %982 = vmatpush.bf16.msra.mxu0 %v755
    %983 = vmatpush.bf16.msra.mxu0 %v751
    %984 = vmatpush.bf16.msra.mxu0 %v747
    %985 = vmatpush.bf16.msra.mxu0 %v743
    %986 = vmatpush.bf16.msra.mxu0 %v739
    %987 = vmatpush.bf16.msra.mxu0 %v735
    %988 = vmatpush.bf16.msra.mxu0 %v731
    %989 = vmatmul.bf16.gmra.mxu0 %v111
    %v990 = vpop.f32.mrf.mxu0
    %v991 = vadd.f32 %v978, %v990
    %v992 = vpop.f32.mrf.mxu0
    %993 = vdwg.mxu0
    %994 = vmatpush.bf16.msra.mxu0 %v664
    %995 = vmatpush.bf16.msra.mxu0 %v660
    %996 = vmatpush.bf16.msra.mxu0 %v656
    %997 = vmatpush.bf16.msra.mxu0 %v652
    %998 = vmatpush.bf16.msra.mxu0 %v648
    %999 = vmatpush.bf16.msra.mxu0 %v644
    %1000 = vmatpush.bf16.msra.mxu0 %v640
    %1001 = vmatpush.bf16.msra.mxu0 %v636
    %1002 = vmatmul.bf16.gmra.mxu0 %v108
    %v1003 = vpop.f32.mrf.mxu0
    %v1004 = vadd.f32 %v244, %v1003
    %v1005 = vpop.f32.mrf.mxu0
    %1006 = vdwg.mxu0
    %1007 = vmatpush.bf16.msra.mxu0 %v696
    %1008 = vmatpush.bf16.msra.mxu0 %v692
    %1009 = vmatpush.bf16.msra.mxu0 %v688
    %1010 = vmatpush.bf16.msra.mxu0 %v684
    %1011 = vmatpush.bf16.msra.mxu0 %v680
    %1012 = vmatpush.bf16.msra.mxu0 %v676
    %1013 = vmatpush.bf16.msra.mxu0 %v672
    %1014 = vmatpush.bf16.msra.mxu0 %v668
    %1015 = vmatmul.bf16.gmra.mxu0 %v109
    %v1016 = vpop.f32.mrf.mxu0
    %v1017 = vadd.f32 %v1004, %v1016
    %v1018 = vpop.f32.mrf.mxu0
    %1019 = vdwg.mxu0
    %1020 = vmatpush.bf16.msra.mxu0 %v728
    %1021 = vmatpush.bf16.msra.mxu0 %v724
    %1022 = vmatpush.bf16.msra.mxu0 %v720
    %1023 = vmatpush.bf16.msra.mxu0 %v716
    %1024 = vmatpush.bf16.msra.mxu0 %v712
    %1025 = vmatpush.bf16.msra.mxu0 %v708
    %1026 = vmatpush.bf16.msra.mxu0 %v704
    %1027 = vmatpush.bf16.msra.mxu0 %v700
    %1028 = vmatmul.bf16.gmra.mxu0 %v110
    %v1029 = vpop.f32.mrf.mxu0
    %v1030 = vadd.f32 %v1017, %v1029
    %v1031 = vpop.f32.mrf.mxu0
    %1032 = vdwg.mxu0
    %1033 = vmatpush.bf16.msra.mxu0 %v760
    %1034 = vmatpush.bf16.msra.mxu0 %v756
    %1035 = vmatpush.bf16.msra.mxu0 %v752
    %1036 = vmatpush.bf16.msra.mxu0 %v748
    %1037 = vmatpush.bf16.msra.mxu0 %v744
    %1038 = vmatpush.bf16.msra.mxu0 %v740
    %1039 = vmatpush.bf16.msra.mxu0 %v736
    %1040 = vmatpush.bf16.msra.mxu0 %v732
    %1041 = vmatmul.bf16.gmra.mxu0 %v111
    %v1042 = vpop.f32.mrf.mxu0
    %v1043 = vadd.f32 %v1030, %v1042
    %v1044 = vpop.f32.mrf.mxu0
    %1045 = vdwg.mxu0
    %1046 = vmatpush.bf16.msra.mxu0 %v665
    %1047 = vmatpush.bf16.msra.mxu0 %v661
    %1048 = vmatpush.bf16.msra.mxu0 %v657
    %1049 = vmatpush.bf16.msra.mxu0 %v653
    %1050 = vmatpush.bf16.msra.mxu0 %v649
    %1051 = vmatpush.bf16.msra.mxu0 %v645
    %1052 = vmatpush.bf16.msra.mxu0 %v641
    %1053 = vmatpush.bf16.msra.mxu0 %v637
    %1054 = vmatmul.bf16.gmra.mxu0 %v108
    %v1055 = vpop.f32.mrf.mxu0
    %v1056 = vadd.f32 %v245, %v1055
    %v1057 = vpop.f32.mrf.mxu0
    %1058 = vdwg.mxu0
    %1059 = vmatpush.bf16.msra.mxu0 %v697
    %1060 = vmatpush.bf16.msra.mxu0 %v693
    %1061 = vmatpush.bf16.msra.mxu0 %v689
    %1062 = vmatpush.bf16.msra.mxu0 %v685
    %1063 = vmatpush.bf16.msra.mxu0 %v681
    %1064 = vmatpush.bf16.msra.mxu0 %v677
    %1065 = vmatpush.bf16.msra.mxu0 %v673
    %1066 = vmatpush.bf16.msra.mxu0 %v669
    %1067 = vmatmul.bf16.gmra.mxu0 %v109
    %v1068 = vpop.f32.mrf.mxu0
    %v1069 = vadd.f32 %v1056, %v1068
    %v1070 = vpop.f32.mrf.mxu0
    %1071 = vdwg.mxu0
    %1072 = vmatpush.bf16.msra.mxu0 %v729
    %1073 = vmatpush.bf16.msra.mxu0 %v725
    %1074 = vmatpush.bf16.msra.mxu0 %v721
    %1075 = vmatpush.bf16.msra.mxu0 %v717
    %1076 = vmatpush.bf16.msra.mxu0 %v713
    %1077 = vmatpush.bf16.msra.mxu0 %v709
    %1078 = vmatpush.bf16.msra.mxu0 %v705
    %1079 = vmatpush.bf16.msra.mxu0 %v701
    %1080 = vmatmul.bf16.gmra.mxu0 %v110
    %v1081 = vpop.f32.mrf.mxu0
    %v1082 = vadd.f32 %v1069, %v1081
    %v1083 = vpop.f32.mrf.mxu0
    %1084 = vdwg.mxu0
    %1085 = vmatpush.bf16.msra.mxu0 %v761
    %1086 = vmatpush.bf16.msra.mxu0 %v757
    %1087 = vmatpush.bf16.msra.mxu0 %v753
    %1088 = vmatpush.bf16.msra.mxu0 %v749
    %1089 = vmatpush.bf16.msra.mxu0 %v745
    %1090 = vmatpush.bf16.msra.mxu0 %v741
    %1091 = vmatpush.bf16.msra.mxu0 %v737
    %1092 = vmatpush.bf16.msra.mxu0 %v733
    %1093 = vmatmul.bf16.gmra.mxu0 %v111
    %v1094 = vpop.f32.mrf.mxu0
    %v1095 = vadd.f32 %v1082, %v1094
    %v1096 = vpop.f32.mrf.mxu0
    %1097 = vdwg.mxu0
    %v1098 = vmax.f32 %v939, 0.0
    %v1099 = vmax.f32 %v991, 0.0
    %v1100 = vmax.f32 %v1043, 0.0
    %v1101 = vmax.f32 %v1095, 0.0
    %v1102 = vpack.c.bf16 %v1098, %v1098
    %v1103 = vpack.c.bf16 %v1099, %v1099
    %v1104 = vpack.c.bf16 %v1100, %v1100
    %v1105 = vpack.c.bf16 %v1101, %v1101
    %v1106 = vld [vmem:[%s5] sm:$0xf]
    %v1107 = vld [vmem:[%s5 + $0x4] sm:$0xf]
    %v1108 = vld [vmem:[%s5 + $0x8] sm:$0xf]
    %v1109 = vld [vmem:[%s5 + $0xc] sm:$0xf]
    %v1110 = vld [vmem:[%s5 + $0x10] sm:$0xf]
    %v1111 = vld [vmem:[%s5 + $0x14] sm:$0xf]
    %v1112 = vld [vmem:[%s5 + $0x18] sm:$0xf]
    %v1113 = vld [vmem:[%s5 + $0x1c] sm:$0xf]
    %v1114 = vld [vmem:[%s5 + $0x20] sm:$0xf]
    %v1115 = vld [vmem:[%s5 + $0x24] sm:$0xf]
    %v1116 = vld [vmem:[%s5 + $0x28] sm:$0xf]
    %v1117 = vld [vmem:[%s5 + $0x2c] sm:$0xf]
    %v1118 = vld [vmem:[%s5 + $0x30] sm:$0xf]
    %v1119 = vld [vmem:[%s5 + $0x34] sm:$0xf]
    %v1120 = vld [vmem:[%s5 + $0x38] sm:$0xf]
    %v1121 = vld [vmem:[%s5 + $0x3c] sm:$0xf]
    %v1122 = vld [vmem:[%s5 + $0x40] sm:$0xf]
    %v1123 = vld [vmem:[%s5 + $0x44] sm:$0xf]
    %v1124 = vld [vmem:[%s5 + $0x48] sm:$0xf]
    %v1125 = vld [vmem:[%s5 + $0x4c] sm:$0xf]
    %v1126 = vld [vmem:[%s5 + $0x50] sm:$0xf]
    %v1127 = vld [vmem:[%s5 + $0x54] sm:$0xf]
    %v1128 = vld [vmem:[%s5 + $0x58] sm:$0xf]
    %v1129 = vld [vmem:[%s5 + $0x5c] sm:$0xf]
    %v1130 = vld [vmem:[%s5 + $0x60] sm:$0xf]
    %v1131 = vld [vmem:[%s5 + $0x64] sm:$0xf]
    %v1132 = vld [vmem:[%s5 + $0x68] sm:$0xf]
    %v1133 = vld [vmem:[%s5 + $0x6c] sm:$0xf]
    %v1134 = vld [vmem:[%s5 + $0x70] sm:$0xf]
    %v1135 = vld [vmem:[%s5 + $0x74] sm:$0xf]
    %v1136 = vld [vmem:[%s5 + $0x78] sm:$0xf]
    %v1137 = vld [vmem:[%s5 + $0x7c] sm:$0xf]
    %v1138 = vld [vmem:[%s5 + $0x80] sm:$0xf]
    %v1139 = vld [vmem:[%s5 + $0x84] sm:$0xf]
    %v1140 = vld [vmem:[%s5 + $0x88] sm:$0xf]
    %v1141 = vld [vmem:[%s5 + $0x8c] sm:$0xf]
    %v1142 = vld [vmem:[%s5 + $0x90] sm:$0xf]
    %v1143 = vld [vmem:[%s5 + $0x94] sm:$0xf]
    %v1144 = vld [vmem:[%s5 + $0x98] sm:$0xf]
    %v1145 = vld [vmem:[%s5 + $0x9c] sm:$0xf]
    %v1146 = vld [vmem:[%s5 + $0xa0] sm:$0xf]
    %v1147 = vld [vmem:[%s5 + $0xa4] sm:$0xf]
    %v1148 = vld [vmem:[%s5 + $0xa8] sm:$0xf]
    %v1149 = vld [vmem:[%s5 + $0xac] sm:$0xf]
    %v1150 = vld [vmem:[%s5 + $0xb0] sm:$0xf]
    %v1151 = vld [vmem:[%s5 + $0xb4] sm:$0xf]
    %v1152 = vld [vmem:[%s5 + $0xb8] sm:$0xf]
    %v1153 = vld [vmem:[%s5 + $0xbc] sm:$0xf]
    %v1154 = vld [vmem:[%s5 + $0xc0] sm:$0xf]
    %v1155 = vld [vmem:[%s5 + $0xc4] sm:$0xf]
    %v1156 = vld [vmem:[%s5 + $0xc8] sm:$0xf]
    %v1157 = vld [vmem:[%s5 + $0xcc] sm:$0xf]
    %v1158 = vld [vmem:[%s5 + $0xd0] sm:$0xf]
    %v1159 = vld [vmem:[%s5 + $0xd4] sm:$0xf]
    %v1160 = vld [vmem:[%s5 + $0xd8] sm:$0xf]
    %v1161 = vld [vmem:[%s5 + $0xdc] sm:$0xf]
    %v1162 = vld [vmem:[%s5 + $0xe0] sm:$0xf]
    %v1163 = vld [vmem:[%s5 + $0xe4] sm:$0xf]
    %v1164 = vld [vmem:[%s5 + $0xe8] sm:$0xf]
    %v1165 = vld [vmem:[%s5 + $0xec] sm:$0xf]
    %v1166 = vld [vmem:[%s5 + $0xf0] sm:$0xf]
    %v1167 = vld [vmem:[%s5 + $0xf4] sm:$0xf]
    %v1168 = vld [vmem:[%s5 + $0xf8] sm:$0xf]
    %v1169 = vld [vmem:[%s5 + $0xfc] sm:$0xf]
    %v1170 = vld [vmem:[%s6] sm:$0x1]
    %v1172 = vperm.slane %v1170, 0
    %v1238 = vunpack.c.l.b16 %v1106
    %v1239 = vunpack.c.l.b16 %v1107
    %v1240 = vunpack.c.l.b16 %v1108
    %v1241 = vunpack.c.l.b16 %v1109
    %v1242 = vunpack.c.l.b16 %v1110
    %v1243 = vunpack.c.l.b16 %v1111
    %v1244 = vunpack.c.l.b16 %v1112
    %v1245 = vunpack.c.l.b16 %v1113
    %v1246 = vunpack.c.l.b16 %v1114
    %v1247 = vunpack.c.l.b16 %v1115
    %v1248 = vunpack.c.l.b16 %v1116
    %v1249 = vunpack.c.l.b16 %v1117
    %v1250 = vunpack.c.l.b16 %v1118
    %v1251 = vunpack.c.l.b16 %v1119
    %v1252 = vunpack.c.l.b16 %v1120
    %v1253 = vunpack.c.l.b16 %v1121
    %v1254 = vunpack.c.l.b16 %v1122
    %v1255 = vunpack.c.l.b16 %v1123
    %v1256 = vunpack.c.l.b16 %v1124
    %v1257 = vunpack.c.l.b16 %v1125
    %v1258 = vunpack.c.l.b16 %v1126
    %v1259 = vunpack.c.l.b16 %v1127
    %v1260 = vunpack.c.l.b16 %v1128
    %v1261 = vunpack.c.l.b16 %v1129
    %v1262 = vunpack.c.l.b16 %v1130
    %v1263 = vunpack.c.l.b16 %v1131
    %v1264 = vunpack.c.l.b16 %v1132
    %v1265 = vunpack.c.l.b16 %v1133
    %v1266 = vunpack.c.l.b16 %v1134
    %v1267 = vunpack.c.l.b16 %v1135
    %v1268 = vunpack.c.l.b16 %v1136
    %v1269 = vunpack.c.l.b16 %v1137
    %v1270 = vunpack.c.l.b16 %v1138
    %v1271 = vunpack.c.l.b16 %v1139
    %v1272 = vunpack.c.l.b16 %v1140
    %v1273 = vunpack.c.l.b16 %v1141
    %v1274 = vunpack.c.l.b16 %v1142
    %v1275 = vunpack.c.l.b16 %v1143
    %v1276 = vunpack.c.l.b16 %v1144
    %v1277 = vunpack.c.l.b16 %v1145
    %v1278 = vunpack.c.l.b16 %v1146
    %v1279 = vunpack.c.l.b16 %v1147
    %v1280 = vunpack.c.l.b16 %v1148
    %v1281 = vunpack.c.l.b16 %v1149
    %v1282 = vunpack.c.l.b16 %v1150
    %v1283 = vunpack.c.l.b16 %v1151
    %v1284 = vunpack.c.l.b16 %v1152
    %v1285 = vunpack.c.l.b16 %v1153
    %v1286 = vunpack.c.l.b16 %v1154
    %v1287 = vunpack.c.l.b16 %v1155
    %v1288 = vunpack.c.l.b16 %v1156
    %v1289 = vunpack.c.l.b16 %v1157
    %v1290 = vunpack.c.l.b16 %v1158
    %v1291 = vunpack.c.l.b16 %v1159
    %v1292 = vunpack.c.l.b16 %v1160
    %v1293 = vunpack.c.l.b16 %v1161
    %v1294 = vunpack.c.l.b16 %v1162
    %v1295 = vunpack.c.l.b16 %v1163
    %v1296 = vunpack.c.l.b16 %v1164
    %v1297 = vunpack.c.l.b16 %v1165
    %v1298 = vunpack.c.l.b16 %v1166
    %v1299 = vunpack.c.l.b16 %v1167
    %v1300 = vunpack.c.l.b16 %v1168
    %v1301 = vunpack.c.l.b16 %v1169
    %v1302 = vpack.c.b16 %v1239, %v1238
    %v1303 = vpack.c.b16 %v1241, %v1240
    %v1304 = vpack.c.b16 %v1243, %v1242
    %v1305 = vpack.c.b16 %v1245, %v1244
    %v1306 = vpack.c.b16 %v1247, %v1246
    %v1307 = vpack.c.b16 %v1249, %v1248
    %v1308 = vpack.c.b16 %v1251, %v1250
    %v1309 = vpack.c.b16 %v1253, %v1252
    %v1310 = vpack.c.b16 %v1255, %v1254
    %v1311 = vpack.c.b16 %v1257, %v1256
    %v1312 = vpack.c.b16 %v1259, %v1258
    %v1313 = vpack.c.b16 %v1261, %v1260
    %v1314 = vpack.c.b16 %v1263, %v1262
    %v1315 = vpack.c.b16 %v1265, %v1264
    %v1316 = vpack.c.b16 %v1267, %v1266
    %v1317 = vpack.c.b16 %v1269, %v1268
    %v1318 = vpack.c.b16 %v1271, %v1270
    %v1319 = vpack.c.b16 %v1273, %v1272
    %v1320 = vpack.c.b16 %v1275, %v1274
    %v1321 = vpack.c.b16 %v1277, %v1276
    %v1322 = vpack.c.b16 %v1279, %v1278
    %v1323 = vpack.c.b16 %v1281, %v1280
    %v1324 = vpack.c.b16 %v1283, %v1282
    %v1325 = vpack.c.b16 %v1285, %v1284
    %v1326 = vpack.c.b16 %v1287, %v1286
    %v1327 = vpack.c.b16 %v1289, %v1288
    %v1328 = vpack.c.b16 %v1291, %v1290
    %v1329 = vpack.c.b16 %v1293, %v1292
    %v1330 = vpack.c.b16 %v1295, %v1294
    %v1331 = vpack.c.b16 %v1297, %v1296
    %v1332 = vpack.c.b16 %v1299, %v1298
    %v1333 = vpack.c.b16 %v1301, %v1300
    %1366 = vmatpush.bf16.msra.mxu0 %v1309
    %1367 = vmatpush.bf16.msra.mxu0 %v1308
    %1368 = vmatpush.bf16.msra.mxu0 %v1307
    %1369 = vmatpush.bf16.msra.mxu0 %v1306
    %1370 = vmatpush.bf16.msra.mxu0 %v1305
    %1371 = vmatpush.bf16.msra.mxu0 %v1304
    %1372 = vmatpush.bf16.msra.mxu0 %v1303
    %1373 = vmatpush.bf16.msra.mxu0 %v1302
    %1374 = vmatmul.bf16.gmra.mxu0 %v1102
    %v1375 = vpop.f32.mrf.mxu0
    %v1376 = vadd.f32 %v1172, %v1375
    %v1377 = vpop.f32.mrf.mxu0
    %1378 = vdwg.mxu0
    %1379 = vmatpush.bf16.msra.mxu0 %v1317
    %1380 = vmatpush.bf16.msra.mxu0 %v1316
    %1381 = vmatpush.bf16.msra.mxu0 %v1315
    %1382 = vmatpush.bf16.msra.mxu0 %v1314
    %1383 = vmatpush.bf16.msra.mxu0 %v1313
    %1384 = vmatpush.bf16.msra.mxu0 %v1312
    %1385 = vmatpush.bf16.msra.mxu0 %v1311
    %1386 = vmatpush.bf16.msra.mxu0 %v1310
    %1387 = vmatmul.bf16.gmra.mxu0 %v1103
    %v1388 = vpop.f32.mrf.mxu0
    %v1389 = vadd.f32 %v1376, %v1388
    %v1390 = vpop.f32.mrf.mxu0
    %1391 = vdwg.mxu0
    %1392 = vmatpush.bf16.msra.mxu0 %v1325
    %1393 = vmatpush.bf16.msra.mxu0 %v1324
    %1394 = vmatpush.bf16.msra.mxu0 %v1323
    %1395 = vmatpush.bf16.msra.mxu0 %v1322
    %1396 = vmatpush.bf16.msra.mxu0 %v1321
    %1397 = vmatpush.bf16.msra.mxu0 %v1320
    %1398 = vmatpush.bf16.msra.mxu0 %v1319
    %1399 = vmatpush.bf16.msra.mxu0 %v1318
    %1400 = vmatmul.bf16.gmra.mxu0 %v1104
    %v1401 = vpop.f32.mrf.mxu0
    %v1402 = vadd.f32 %v1389, %v1401
    %v1403 = vpop.f32.mrf.mxu0
    %1404 = vdwg.mxu0
    %1405 = vmatpush.bf16.msra.mxu0 %v1333
    %1406 = vmatpush.bf16.msra.mxu0 %v1332
    %1407 = vmatpush.bf16.msra.mxu0 %v1331
    %1408 = vmatpush.bf16.msra.mxu0 %v1330
    %1409 = vmatpush.bf16.msra.mxu0 %v1329
    %1410 = vmatpush.bf16.msra.mxu0 %v1328
    %1411 = vmatpush.bf16.msra.mxu0 %v1327
    %1412 = vmatpush.bf16.msra.mxu0 %v1326
    %1413 = vmatmul.bf16.gmra.mxu0 %v1105
    %v1414 = vpop.f32.mrf.mxu0
    %v1415 = vadd.f32 %v1402, %v1414
    %v1416 = vpop.f32.mrf.mxu0
    %1417 = vdwg.mxu0
    %vm1418 = vcmask 15360
    %1419 = vst.msk [vmem:[%s7] sm:$0xff] %vm1418, %v1415
    // Predicated region
    $region34: #{tpu_custom_call.1} parent=1 // pred_check
      _
    $region35: #{tpu_custom_call.1} parent=1 // pred_check_branch
      %1421 = sbr.rel (0) target = $region37
    $region36: #{tpu_custom_call.1} parent=1 // pred_region
      _
    $region37: #{tpu_custom_call.1} parent=1 // pred_fallthru
      _
    // Predicated region
    $region38: #{tpu_custom_call.1} parent=1 // pred_check
      _
    $region39: #{tpu_custom_call.1} parent=1 // pred_check_branch
      %1423 = sbr.rel (0) target = $region41
    $region40: #{tpu_custom_call.1} parent=1 // pred_region
      _
    $region41: #{tpu_custom_call.1} parent=1 // pred_fallthru
      _
    %1424 = vsyncpa [#allocation3], 1

</llo_original>
